<compile_context>
chip_gen: v7x
topology: tpu7x:2x2x1
jax: 0.10.0
libtpu: 0.0.40
codegen_flags: <defaults>
</compile_context>

<pallas_src>
import functools

import jax
import jax.numpy as jnp
from jax.experimental import pallas as pl
from jax.experimental.pallas import tpu as pltpu


LANE = 128      # vreg lane width (last dim)
SUBLANE = 8     # f32 sublane count (second-to-last dim)

# Per-grid-step fixed overhead (~0.35 us) expressed as "equivalent padded rows"
# for the batch-tile chooser.
_STEP_OVERHEAD_ROWS = 64


def _round_up(n, m):
    return ((n + m - 1) // m) * m


def _max_batch_tile():
    """128 on v5e (4x128^2 MXU already saturated); 256 on v6e/v7x (2x256^2)."""
    try:
        kind = jax.devices()[0].device_kind.lower()
    except Exception:
        return 128
    return 128 if "v5" in kind else 256


def _choose_batch_tile(B):
    """Pick a batch tile (multiple of 8) minimizing padded rows + step overhead."""
    max_tile = _max_batch_tile()
    cands = sorted({t for t in (8, 16, 32, 64, 128, 256, _round_up(B, SUBLANE))
                    if SUBLANE <= t <= max_tile and t % SUBLANE == 0})

    def cost(t):
        b_pad = _round_up(B, t)
        steps = b_pad // t
        return b_pad + _STEP_OVERHEAD_ROWS * steps

    # tie-break: prefer the larger tile (better MXU utilization per step)
    return min(cands, key=lambda t: (cost(t), -t))


def _mlp_kernel(*refs, num_layers: int):
    """Fused MLP: x -> [Linear (+ReLU)] * (L-1) -> Linear -> out.

    refs = (x_ref, w0_ref, b0_ref, w1_ref, b1_ref, ..., o_ref)
    Hidden/output feature dims are pre-padded to multiples of 128 with zeros,
    so padded channels carry zeros through every layer and the final slice
    (done by the wrapper) is exact.  Weights are bf16; accumulation is f32.
    """
    x_ref = refs[0]
    o_ref = refs[-1]
    x = x_ref[...]                               # f32 (tb, in_dim)
    for i in range(num_layers):
        w = refs[1 + 2 * i][...]                 # bf16 (in_i, out_pad_i)
        b = refs[2 + 2 * i][...]                 # f32  (1, out_pad_i) -> broadcasts
        y = jnp.dot(x.astype(w.dtype), w,
                    preferred_element_type=jnp.float32) + b
        x = jnp.maximum(y, 0.0) if i != num_layers - 1 else y
    o_ref[...] = x                               # f32, lane-dense (tb, out_pad)


def prepare_qnetwork_params(params):
    """One-time preprocessing (do NOT call per forward).

    Zero-pads hidden/output dims to the 128-lane width (the first layer's
    input dim is left unpadded), casts weights to bf16, keeps biases f32.
    Returns (weights, biases) tuples of device-resident arrays.
    """
    weights, biases = [], []
    prev = params[0][0].shape[0]                 # state_size, unpadded
    for (w, b) in params:
        fi, fo = w.shape
        fo_pad = _round_up(fo, LANE)
        w_p = jnp.zeros((prev, fo_pad), jnp.float32).at[:fi, :fo].set(w)
        b_p = jnp.zeros((1, fo_pad), jnp.float32).at[:, :fo].set(b)
        weights.append(w_p.astype(jnp.bfloat16))
        biases.append(b_p)
        prev = fo_pad
    return tuple(weights), tuple(biases)


@functools.partial(jax.jit, static_argnames=("action_size",))
def qnetwork_forward(state, weights, biases, *, action_size):
    """Forward pass of the QNetwork with a single fused Pallas kernel.

    state:   (B, state_size) float32
    weights: tuple of bf16 (in_i, out_pad_i) from prepare_qnetwork_params
    biases:  tuple of f32  (1, out_pad_i)   from prepare_qnetwork_params
    returns  (B, action_size) float32
    """
    B, in_dim = state.shape
    num_layers = len(weights)
    out_pad = weights[-1].shape[1]

    tb = _choose_batch_tile(B)
    b_pad = _round_up(B, tb)

    x = state.astype(jnp.float32)
    if b_pad != B:
        x = jnp.pad(x, ((0, b_pad - B), (0, 0)))

    # Input block keeps the real feature width (full-array dim -> exempt from
    # the 128-lane divisibility rule); weights/biases are full-array blocks
    # with a constant index_map so they stay VMEM-resident across the grid.
    in_specs = [pl.BlockSpec((tb, in_dim), lambda i: (i, 0))]
    flat_params = []
    for (w, b) in zip(weights, biases):
        in_specs.append(pl.BlockSpec(w.shape, lambda i: (0, 0)))   # resident
        in_specs.append(pl.BlockSpec(b.shape, lambda i: (0, 0)))   # resident
        flat_params.extend([w, b])
    # (Single-buffering the constant weight blocks via pl.Buffered(1) was
    #  suggested; skipped here since VMEM headroom is huge at these sizes.)

    out_padded = pl.pallas_call(
        functools.partial(_mlp_kernel, num_layers=num_layers),
        out_shape=jax.ShapeDtypeStruct((b_pad, out_pad), jnp.float32),
        grid=(b_pad // tb,),
        in_specs=in_specs,
        out_specs=pl.BlockSpec((tb, out_pad), lambda i: (i, 0)),
        compiler_params=pltpu.CompilerParams(
            dimension_semantics=("parallel",)),
    )(x, *flat_params)

    return out_padded[:B, :action_size]


def init_qnetwork_params(key, state_size, action_size, list_number_units_hidden):
    """Deterministic init matching nn.Linear shapes (uniform +-1/sqrt(fan_in)).

    Note: params are (in, out); PyTorch nn.Linear weights are (out, in) and
    must be transposed when importing real checkpoints.
    """
    dims = [state_size] + list(list_number_units_hidden) + [action_size]
    params = []
    for i in range(len(dims) - 1):
        fan_in, fan_out = dims[i], dims[i + 1]
        key, kw, kb = jax.random.split(key, 3)
        bound = 1.0 / jnp.sqrt(jnp.float32(fan_in))
        w = jax.random.uniform(kw, (fan_in, fan_out), jnp.float32, -bound, bound)
        b = jax.random.uniform(kb, (1, fan_out), jnp.float32, -bound, bound)
        params.append((w, b))
    return params


def qnetwork_reference(state, params):
    """Pure-JAX f32 reference for correctness checking."""
    x = state
    n = len(params)
    for i, (w, b) in enumerate(params):
        x = x @ w + b
        if i != n - 1:
            x = jnp.maximum(x, 0.0)
    return x


if __name__ == "__main__":
    # Small shapes consistent with the module: state_size=16, hidden=[32, 32],
    # action_size=4, batch=2.
    state_size = 16
    action_size = 4
    list_number_units_hidden = [32, 32]
    batch = 2

    key = jax.random.PRNGKey(0)
    key, kx = jax.random.split(key)
    state = jax.random.normal(kx, (batch, state_size), jnp.float32)

    params = init_qnetwork_params(key, state_size, action_size,
                                  list_number_units_hidden)

    # One-time preprocessing (hoisted out of the per-call path).
    weights, biases = prepare_qnetwork_params(params)

    out = qnetwork_forward(state, weights, biases, action_size=action_size)
    out = jax.block_until_ready(out)

    ref = qnetwork_reference(state, params)
    assert out.shape == (batch, action_size)
    # bf16 weights => compare against the f32 reference at a loosened tolerance.
    assert jnp.allclose(out, ref, atol=5e-2, rtol=5e-2), float(
        jnp.max(jnp.abs(out - ref)))

    print("KERNEL_OK")
</pallas_src>

<mosaic_0001>
module attributes {stable_mosaic.version = 11 : i64} {
  func.func @_mlp_kernel(%arg0: i32, %arg1: memref<8x16xf32, #tpu.memory_space<vmem>>, %arg2: memref<16x128xbf16, #tpu.memory_space<vmem>>, %arg3: memref<1x128xf32, #tpu.memory_space<vmem>>, %arg4: memref<128x128xbf16, #tpu.memory_space<vmem>>, %arg5: memref<1x128xf32, #tpu.memory_space<vmem>>, %arg6: memref<128x128xbf16, #tpu.memory_space<vmem>>, %arg7: memref<1x128xf32, #tpu.memory_space<vmem>>, %arg8: memref<8x128xf32, #tpu.memory_space<vmem>>) attributes {dimension_semantics = [#tpu.dimension_semantics<parallel>], iteration_bounds = array<i64: 1>, scalar_prefetch = 0 : i64, scratch_operands = 0 : i64, tpu.core_type = #tpu.core_type<tc>, window_params = [{transform_indices = @transform_0, window_bounds = array<i64: 8, 16>}, {pipeline_mode = #tpu.pipeline_mode<synchronous>, transform_indices = @transform_1, window_bounds = array<i64: 16, 128>}, {pipeline_mode = #tpu.pipeline_mode<synchronous>, transform_indices = @transform_2, window_bounds = array<i64: 1, 128>}, {pipeline_mode = #tpu.pipeline_mode<synchronous>, transform_indices = @transform_3, window_bounds = array<i64: 128, 128>}, {pipeline_mode = #tpu.pipeline_mode<synchronous>, transform_indices = @transform_4, window_bounds = array<i64: 1, 128>}, {pipeline_mode = #tpu.pipeline_mode<synchronous>, transform_indices = @transform_5, window_bounds = array<i64: 128, 128>}, {pipeline_mode = #tpu.pipeline_mode<synchronous>, transform_indices = @transform_6, window_bounds = array<i64: 1, 128>}, {transform_indices = @transform_7, window_bounds = array<i64: 8, 128>}]} {
    %c0 = arith.constant 0 : index
    %c0_0 = arith.constant 0 : index
    %0 = vector.load %arg1[%c0, %c0_0] : memref<8x16xf32, #tpu.memory_space<vmem>>, vector<8x16xf32>
    %c0_1 = arith.constant 0 : index
    %c0_2 = arith.constant 0 : index
    %1 = vector.load %arg2[%c0_1, %c0_2] : memref<16x128xbf16, #tpu.memory_space<vmem>>, vector<16x128xbf16>
    %c0_3 = arith.constant 0 : index
    %c0_4 = arith.constant 0 : index
    %2 = vector.load %arg3[%c0_3, %c0_4] : memref<1x128xf32, #tpu.memory_space<vmem>>, vector<1x128xf32>
    %3 = arith.truncf %0 : vector<8x16xf32> to vector<8x16xbf16>
    %cst = arith.constant dense<0.000000e+00> : vector<8x128xf32>
    %4 = tpu.matmul %3, %1, %cst {dimension_numbers = #tpu.dot_dimension_numbers<[1], [0], [0], [1], [0, 0, 1, 1], [], []>} : vector<8x16xbf16>, vector<16x128xbf16>, vector<8x128xf32> -> vector<8x128xf32>
    %5 = vector.broadcast %2 : vector<1x128xf32> to vector<8x128xf32>
    %6 = arith.addf %4, %5 : vector<8x128xf32>
    %cst_5 = arith.constant 0.000000e+00 : f32
    %7 = vector.broadcast %cst_5 : f32 to vector<8x128xf32>
    %8 = arith.maximumf %6, %7 : vector<8x128xf32>
    %c0_6 = arith.constant 0 : index
    %c0_7 = arith.constant 0 : index
    %9 = vector.load %arg4[%c0_6, %c0_7] : memref<128x128xbf16, #tpu.memory_space<vmem>>, vector<128x128xbf16>
    %c0_8 = arith.constant 0 : index
    %c0_9 = arith.constant 0 : index
    %10 = vector.load %arg5[%c0_8, %c0_9] : memref<1x128xf32, #tpu.memory_space<vmem>>, vector<1x128xf32>
    %11 = arith.truncf %8 : vector<8x128xf32> to vector<8x128xbf16>
    %cst_10 = arith.constant dense<0.000000e+00> : vector<8x128xf32>
    %12 = tpu.matmul %11, %9, %cst_10 {dimension_numbers = #tpu.dot_dimension_numbers<[1], [0], [0], [1], [0, 0, 1, 1], [], []>} : vector<8x128xbf16>, vector<128x128xbf16>, vector<8x128xf32> -> vector<8x128xf32>
    %13 = vector.broadcast %10 : vector<1x128xf32> to vector<8x128xf32>
    %14 = arith.addf %12, %13 : vector<8x128xf32>
    %cst_11 = arith.constant 0.000000e+00 : f32
    %15 = vector.broadcast %cst_11 : f32 to vector<8x128xf32>
    %16 = arith.maximumf %14, %15 : vector<8x128xf32>
    %c0_12 = arith.constant 0 : index
    %c0_13 = arith.constant 0 : index
    %17 = vector.load %arg6[%c0_12, %c0_13] : memref<128x128xbf16, #tpu.memory_space<vmem>>, vector<128x128xbf16>
    %c0_14 = arith.constant 0 : index
    %c0_15 = arith.constant 0 : index
    %18 = vector.load %arg7[%c0_14, %c0_15] : memref<1x128xf32, #tpu.memory_space<vmem>>, vector<1x128xf32>
    %19 = arith.truncf %16 : vector<8x128xf32> to vector<8x128xbf16>
    %cst_16 = arith.constant dense<0.000000e+00> : vector<8x128xf32>
    %20 = tpu.matmul %19, %17, %cst_16 {dimension_numbers = #tpu.dot_dimension_numbers<[1], [0], [0], [1], [0, 0, 1, 1], [], []>} : vector<8x128xbf16>, vector<128x128xbf16>, vector<8x128xf32> -> vector<8x128xf32>
    %21 = vector.broadcast %18 : vector<1x128xf32> to vector<8x128xf32>
    %22 = arith.addf %20, %21 : vector<8x128xf32>
    %c0_17 = arith.constant 0 : index
    %c0_18 = arith.constant 0 : index
    %23 = vector.load %arg8[%c0_17, %c0_18] : memref<8x128xf32, #tpu.memory_space<vmem>>, vector<8x128xf32>
    tpu.vector_store %arg8[%c0_17, %c0_18], %22 {strides = array<i32>} : memref<8x128xf32, #tpu.memory_space<vmem>>, vector<8x128xf32>,
    return
  }
  func.func @transform_0(%arg0: i32) -> (i32, i32) {
    %c0_i32 = arith.constant 0 : i32
    %c0_i32_0 = arith.constant 0 : i32
    return %arg0, %c0_i32 : i32, i32
  }
  func.func @transform_1(%arg0: i32) -> (i32, i32) {
    %c0_i32 = arith.constant 0 : i32
    %c0_i32_0 = arith.constant 0 : i32
    %c0_i32_1 = arith.constant 0 : i32
    return %c0_i32, %c0_i32_0 : i32, i32
  }
  func.func @transform_2(%arg0: i32) -> (i32, i32) {
    %c0_i32 = arith.constant 0 : i32
    %c0_i32_0 = arith.constant 0 : i32
    %c0_i32_1 = arith.constant 0 : i32
    return %c0_i32, %c0_i32_0 : i32, i32
  }
  func.func @transform_3(%arg0: i32) -> (i32, i32) {
    %c0_i32 = arith.constant 0 : i32
    %c0_i32_0 = arith.constant 0 : i32
    %c0_i32_1 = arith.constant 0 : i32
    return %c0_i32, %c0_i32_0 : i32, i32
  }
  func.func @transform_4(%arg0: i32) -> (i32, i32) {
    %c0_i32 = arith.constant 0 : i32
    %c0_i32_0 = arith.constant 0 : i32
    %c0_i32_1 = arith.constant 0 : i32
    return %c0_i32, %c0_i32_0 : i32, i32
  }
  func.func @transform_5(%arg0: i32) -> (i32, i32) {
    %c0_i32 = arith.constant 0 : i32
    %c0_i32_0 = arith.constant 0 : i32
    %c0_i32_1 = arith.constant 0 : i32
    return %c0_i32, %c0_i32_0 : i32, i32
  }
  func.func @transform_6(%arg0: i32) -> (i32, i32) {
    %c0_i32 = arith.constant 0 : i32
    %c0_i32_0 = arith.constant 0 : i32
    %c0_i32_1 = arith.constant 0 : i32
    return %c0_i32, %c0_i32_0 : i32, i32
  }
  func.func @transform_7(%arg0: i32) -> (i32, i32) {
    %c0_i32 = arith.constant 0 : i32
    %c0_i32_0 = arith.constant 0 : i32
    return %arg0, %c0_i32 : i32, i32
  }
}

</mosaic_0001>

<llo_original>
// kernel: qnetwork_forward.1
$region0: #{qnetwork_forward.1}
  #allocation0 [shape = 'u32[]', space=smem, size = 0x4, offset = 0x4, fixed_abs, tag = 'smem constant byte address 0x4 - core index']
  #allocation1 [shape = 'u32[144,128]{1,0:T(1,128)}', space=vmem, size = 0x12000, scoped, tag = 'internal scratch']
  %s0 = inlined_call_operand.vmem [shape: f32[8,16], index: 0, kind: input, shape index: {}]
  %s1 = inlined_call_operand.vmem [shape: bf16[16,128], index: 1, kind: input, shape index: {}]
  %s2 = inlined_call_operand.vmem [shape: f32[1,128], index: 2, kind: input, shape index: {}]
  %s3 = inlined_call_operand.hbm [shape: bf16[128,128], index: 3, kind: input, shape index: {}]
  %s4 = inlined_call_operand.vmem [shape: f32[1,128], index: 4, kind: input, shape index: {}]
  %s5 = inlined_call_operand.hbm [shape: bf16[128,128], index: 5, kind: input, shape index: {}]
  %s6 = inlined_call_operand.vmem [shape: f32[1,128], index: 6, kind: input, shape index: {}]
  %s7 = inlined_call_operand.vmem [shape: f32[8,128], index: 7, kind: output, shape index: {}]
  %s8 = sld [smem:[#allocation0]]
  $region46: #{qnetwork_forward.1} parent=0
    _
  %s10 = ssub.s32 1, %s8
  %s11 = scalar_select 0, %s10, %s8
  $region1: #{qnetwork_forward.1} parent=0
    #allocation2 [shape = 'u8[32768]{0}', space=vmem, size = 0x8000, scoped, tag = 'input window, operand 3, single buffered']
    #allocation3 [shape = 's32[1]{0}', space=sflag, size = 0x4, scoped, tag = 'scoped memory for qnetwork_forward.1']
    #allocation4 [shape = 'u8[32768]{0}', space=vmem, size = 0x8000, scoped, tag = 'input window, operand 5, single buffered']
    #allocation5 [shape = 's32[1]{0}', space=sflag, size = 0x4, scoped, tag = 'scoped memory for qnetwork_forward.1']
    %12 = vsyncpa [#allocation3], 0
    %13 = vsyncpa [#allocation5], 0
    // Predicated region
    $region2: #{qnetwork_forward.1} parent=1 // pred_check
      _
    $region3: #{qnetwork_forward.1} parent=1 // pred_check_branch
      %15 = sbr.rel (0) target = $region5
    $region4: #{qnetwork_forward.1} parent=1 // pred_region
      _
    $region5: #{qnetwork_forward.1} parent=1 // pred_fallthru
      _
    // Predicated region
    $region6: #{qnetwork_forward.1} parent=1 // pred_check
      _
    $region7: #{qnetwork_forward.1} parent=1 // pred_check_branch
      %17 = sbr.rel (0) target = $region9
    $region8: #{qnetwork_forward.1} parent=1 // pred_region
      _
    $region9: #{qnetwork_forward.1} parent=1 // pred_fallthru
      _
    // Predicated region
    $region10: #{qnetwork_forward.1} parent=1 // pred_check
      _
    $region11: #{qnetwork_forward.1} parent=1 // pred_check_branch
      %19 = sbr.rel (0) target = $region13
    $region12: #{qnetwork_forward.1} parent=1 // pred_region
      _
    $region13: #{qnetwork_forward.1} parent=1 // pred_fallthru
      _
    // Predicated region
    $region14: #{qnetwork_forward.1} parent=1 // pred_check
      _
    $region15: #{qnetwork_forward.1} parent=1 // pred_check_branch
      %21 = sbr.rel (0) target = $region17
    $region16: #{qnetwork_forward.1} parent=1 // pred_region
      %s23 = ssub.s32 1024, 1024
      %24 = vsyncadd [#allocation3], %s23
      %s25 = sshll.u32 [#allocation2], 4
      %s26 = int_to_ptr.vmem [resolvable:$true] %s25
      %31 = dma.hbm_to_vmem [thread:$0]  %s3, 1024, %s26, [#allocation3], 64, 64, 4
    $region17: #{qnetwork_forward.1} parent=1 // pred_fallthru
      _
    // Predicated region
    $region18: #{qnetwork_forward.1} parent=1 // pred_check
      _
    $region19: #{qnetwork_forward.1} parent=1 // pred_check_branch
      %33 = sbr.rel (0) target = $region21
    $region20: #{qnetwork_forward.1} parent=1 // pred_region
      _
    $region21: #{qnetwork_forward.1} parent=1 // pred_fallthru
      _
    // Predicated region
    $region22: #{qnetwork_forward.1} parent=1 // pred_check
      _
    $region23: #{qnetwork_forward.1} parent=1 // pred_check_branch
      %35 = sbr.rel (0) target = $region25
    $region24: #{qnetwork_forward.1} parent=1 // pred_region
      %s37 = ssub.s32 1024, 1024
      %38 = vsyncadd [#allocation5], %s37
      %s39 = sshll.u32 [#allocation4], 4
      %s40 = int_to_ptr.vmem [resolvable:$true] %s39
      %45 = dma.hbm_to_vmem [thread:$0]  %s5, 1024, %s40, [#allocation5], 64, 64, 4
    $region25: #{qnetwork_forward.1} parent=1 // pred_fallthru
      _
    // Predicated region
    $region26: #{qnetwork_forward.1} parent=1 // pred_check
      _
    $region27: #{qnetwork_forward.1} parent=1 // pred_check_branch
      %47 = sbr.rel (0) target = $region29
    $region28: #{qnetwork_forward.1} parent=1 // pred_region
      _
    $region29: #{qnetwork_forward.1} parent=1 // pred_fallthru
      _
    // Predicated region
    $region30: #{qnetwork_forward.1} parent=1 // pred_check
      _
    $region31: #{qnetwork_forward.1} parent=1 // pred_check_branch
      %49 = sbr.rel (0) target = $region33
    $region32: #{qnetwork_forward.1} parent=1 // pred_region
      %50 = dma.done [#allocation3], 1024
    $region33: #{qnetwork_forward.1} parent=1 // pred_fallthru
      _
    // Predicated region
    $region34: #{qnetwork_forward.1} parent=1 // pred_check
      _
    $region35: #{qnetwork_forward.1} parent=1 // pred_check_branch
      %52 = sbr.rel (0) target = $region37
    $region36: #{qnetwork_forward.1} parent=1 // pred_region
      %53 = dma.done [#allocation5], 1024
    $region37: #{qnetwork_forward.1} parent=1 // pred_fallthru
      _
    %v55 = vld [vmem:[%s0] sm:$0xff]
    %v56 = vld [vmem:[%s1] sm:$0xf]
    %v57 = vld [vmem:[%s1 + $0x4] sm:$0xf]
    %v58 = vld [vmem:[%s2] sm:$0x1]
    %v59 = vpack.c.bf16 %v55, %v55
    %v61 = vlaneseq
    %v62 = vshrl.u32 %v61, 7
    %v63 = vsub.s32 0, %v62
    %v64 = vrot.slane %v58, %v63
    %v68 = vunpack.c.l.b16 %v56
    %v69 = vunpack.c.l.b16 %v57
    %v70 = vpack.c.b16 %v69, %v68
    %vm72 = vcmask 130048
    %v74 = vsel %vm72, %v59, 0
    %76 = vmatprep.subr.bf16.mxu0 0
    %77 = vmatpush1.bf16.msra.mxu0 %v70
    %78 = vmatprep.subr.bf16.mxu0 0
    %79 = vmatpush1.bf16.msra.mxu0 0
    %80 = vmatprep.subr.bf16.mxu0 0
    %81 = vmatpush1.bf16.msra.mxu0 0
    %82 = vmatprep.subr.bf16.mxu0 0
    %83 = vmatpush1.bf16.msra.mxu0 0
    %84 = vmatprep.subr.bf16.mxu0 0
    %85 = vmatpush1.bf16.msra.mxu0 0
    %86 = vmatprep.subr.bf16.mxu0 0
    %87 = vmatpush1.bf16.msra.mxu0 0
    %88 = vmatprep.subr.bf16.mxu0 0
    %89 = vmatpush1.bf16.msra.mxu0 0
    %90 = vmatprep.subr.bf16.mxu0 0
    %91 = vmatpush1.bf16.msra.mxu0 0
    %92 = vmatprep.subr.bf16.mxu0 0
    %93 = vmatpush1.bf16.msra.mxu0 0
    %94 = vmatprep.subr.bf16.mxu0 0
    %95 = vmatpush1.bf16.msra.mxu0 0
    %96 = vmatprep.subr.bf16.mxu0 0
    %97 = vmatpush1.bf16.msra.mxu0 0
    %98 = vmatprep.subr.bf16.mxu0 0
    %99 = vmatpush1.bf16.msra.mxu0 0
    %100 = vmatprep.subr.bf16.mxu0 0
    %101 = vmatpush1.bf16.msra.mxu0 0
    %102 = vmatprep.subr.bf16.mxu0 0
    %103 = vmatpush1.bf16.msra.mxu0 0
    %104 = vmatprep.subr.bf16.mxu0 0
    %105 = vmatpush1.bf16.msra.mxu0 0
    %106 = vmatprep.subr.bf16.mxu0 0
    %107 = vmatpush1.bf16.msra.mxu0 0
    %108 = vmatprep.mubr.bf16.mxu0 0
    %109 = vmatmul.mubr.bf16.gmra.mrb[0].mxu0 %v74
    %v110 = vpop.f32.mrb[0].mxu0
    %v111 = vadd.f32 %v64, %v110
    %v112 = vpop.f32.mrb[0].mxu0
    %v113 = vpop.f32.mrb[0].mxu0
    %v114 = vpop.f32.mrb[0].mxu0
    %115 = vdwg.mxu0
    %v116 = vmax.f32 %v111, 0.0
    %v117 = vld [vmem:[#allocation2] sm:$0xf]
    %v118 = vld [vmem:[#allocation2 + $0x4] sm:$0xf]
    %v119 = vld [vmem:[#allocation2 + $0x8] sm:$0xf]
    %v120 = vld [vmem:[#allocation2 + $0xc] sm:$0xf]
    %v121 = vld [vmem:[#allocation2 + $0x10] sm:$0xf]
    %v122 = vld [vmem:[#allocation2 + $0x14] sm:$0xf]
    %v123 = vld [vmem:[#allocation2 + $0x18] sm:$0xf]
    %v124 = vld [vmem:[#allocation2 + $0x1c] sm:$0xf]
    %v125 = vld [vmem:[#allocation2 + $0x20] sm:$0xf]
    %v126 = vld [vmem:[#allocation2 + $0x24] sm:$0xf]
    %v127 = vld [vmem:[#allocation2 + $0x28] sm:$0xf]
    %v128 = vld [vmem:[#allocation2 + $0x2c] sm:$0xf]
    %v129 = vld [vmem:[#allocation2 + $0x30] sm:$0xf]
    %v130 = vld [vmem:[#allocation2 + $0x34] sm:$0xf]
    %v131 = vld [vmem:[#allocation2 + $0x38] sm:$0xf]
    %v132 = vld [vmem:[#allocation2 + $0x3c] sm:$0xf]
    %v133 = vld [vmem:[%s4] sm:$0x1]
    %v134 = vpack.c.bf16 %v116, %v116
    %v136 = vlaneseq
    %v137 = vshrl.u32 %v136, 7
    %v138 = vsub.s32 0, %v137
    %v139 = vrot.slane %v133, %v138
    %v157 = vunpack.c.l.b16 %v117
    %v158 = vunpack.c.l.b16 %v118
    %v159 = vunpack.c.l.b16 %v119
    %v160 = vunpack.c.l.b16 %v120
    %v161 = vunpack.c.l.b16 %v121
    %v162 = vunpack.c.l.b16 %v122
    %v163 = vunpack.c.l.b16 %v123
    %v164 = vunpack.c.l.b16 %v124
    %v165 = vunpack.c.l.b16 %v125
    %v166 = vunpack.c.l.b16 %v126
    %v167 = vunpack.c.l.b16 %v127
    %v168 = vunpack.c.l.b16 %v128
    %v169 = vunpack.c.l.b16 %v129
    %v170 = vunpack.c.l.b16 %v130
    %v171 = vunpack.c.l.b16 %v131
    %v172 = vunpack.c.l.b16 %v132
    %v173 = vpack.c.b16 %v158, %v157
    %v174 = vpack.c.b16 %v160, %v159
    %v175 = vpack.c.b16 %v162, %v161
    %v176 = vpack.c.b16 %v164, %v163
    %v177 = vpack.c.b16 %v166, %v165
    %v178 = vpack.c.b16 %v168, %v167
    %v179 = vpack.c.b16 %v170, %v169
    %v180 = vpack.c.b16 %v172, %v171
    %189 = vmatprep.subr.bf16.mxu0 0
    %190 = vmatpush1.bf16.msra.mxu0 %v173
    %191 = vmatprep.subr.bf16.mxu0 0
    %192 = vmatpush1.bf16.msra.mxu0 %v174
    %193 = vmatprep.subr.bf16.mxu0 0
    %194 = vmatpush1.bf16.msra.mxu0 %v175
    %195 = vmatprep.subr.bf16.mxu0 0
    %196 = vmatpush1.bf16.msra.mxu0 %v176
    %197 = vmatprep.subr.bf16.mxu0 0
    %198 = vmatpush1.bf16.msra.mxu0 %v177
    %199 = vmatprep.subr.bf16.mxu0 0
    %200 = vmatpush1.bf16.msra.mxu0 %v178
    %201 = vmatprep.subr.bf16.mxu0 0
    %202 = vmatpush1.bf16.msra.mxu0 %v179
    %203 = vmatprep.subr.bf16.mxu0 0
    %204 = vmatpush1.bf16.msra.mxu0 %v180
    %205 = vmatprep.subr.bf16.mxu0 0
    %206 = vmatpush1.bf16.msra.mxu0 0
    %207 = vmatprep.subr.bf16.mxu0 0
    %208 = vmatpush1.bf16.msra.mxu0 0
    %209 = vmatprep.subr.bf16.mxu0 0
    %210 = vmatpush1.bf16.msra.mxu0 0
    %211 = vmatprep.subr.bf16.mxu0 0
    %212 = vmatpush1.bf16.msra.mxu0 0
    %213 = vmatprep.subr.bf16.mxu0 0
    %214 = vmatpush1.bf16.msra.mxu0 0
    %215 = vmatprep.subr.bf16.mxu0 0
    %216 = vmatpush1.bf16.msra.mxu0 0
    %217 = vmatprep.subr.bf16.mxu0 0
    %218 = vmatpush1.bf16.msra.mxu0 0
    %219 = vmatprep.subr.bf16.mxu0 0
    %220 = vmatpush1.bf16.msra.mxu0 0
    %221 = vmatprep.mubr.bf16.mxu0 0
    %222 = vmatmul.mubr.bf16.gmra.mrb[0].mxu0 %v134
    %v223 = vpop.f32.mrb[0].mxu0
    %v224 = vadd.f32 %v139, %v223
    %v225 = vpop.f32.mrb[0].mxu0
    %v226 = vpop.f32.mrb[0].mxu0
    %v227 = vpop.f32.mrb[0].mxu0
    %228 = vdwg.mxu0
    %v229 = vmax.f32 %v224, 0.0
    %v230 = vld [vmem:[#allocation4] sm:$0xf]
    %v231 = vld [vmem:[#allocation4 + $0x4] sm:$0xf]
    %v232 = vld [vmem:[#allocation4 + $0x8] sm:$0xf]
    %v233 = vld [vmem:[#allocation4 + $0xc] sm:$0xf]
    %v234 = vld [vmem:[#allocation4 + $0x10] sm:$0xf]
    %v235 = vld [vmem:[#allocation4 + $0x14] sm:$0xf]
    %v236 = vld [vmem:[#allocation4 + $0x18] sm:$0xf]
    %v237 = vld [vmem:[#allocation4 + $0x1c] sm:$0xf]
    %v238 = vld [vmem:[#allocation4 + $0x20] sm:$0xf]
    %v239 = vld [vmem:[#allocation4 + $0x24] sm:$0xf]
    %v240 = vld [vmem:[#allocation4 + $0x28] sm:$0xf]
    %v241 = vld [vmem:[#allocation4 + $0x2c] sm:$0xf]
    %v242 = vld [vmem:[#allocation4 + $0x30] sm:$0xf]
    %v243 = vld [vmem:[#allocation4 + $0x34] sm:$0xf]
    %v244 = vld [vmem:[#allocation4 + $0x38] sm:$0xf]
    %v245 = vld [vmem:[#allocation4 + $0x3c] sm:$0xf]
    %v246 = vld [vmem:[%s6] sm:$0x1]
    %v247 = vpack.c.bf16 %v229, %v229
    %v249 = vlaneseq
    %v250 = vshrl.u32 %v249, 7
    %v251 = vsub.s32 0, %v250
    %v252 = vrot.slane %v246, %v251
    %v270 = vunpack.c.l.b16 %v230
    %v271 = vunpack.c.l.b16 %v231
    %v272 = vunpack.c.l.b16 %v232
    %v273 = vunpack.c.l.b16 %v233
    %v274 = vunpack.c.l.b16 %v234
    %v275 = vunpack.c.l.b16 %v235
    %v276 = vunpack.c.l.b16 %v236
    %v277 = vunpack.c.l.b16 %v237
    %v278 = vunpack.c.l.b16 %v238
    %v279 = vunpack.c.l.b16 %v239
    %v280 = vunpack.c.l.b16 %v240
    %v281 = vunpack.c.l.b16 %v241
    %v282 = vunpack.c.l.b16 %v242
    %v283 = vunpack.c.l.b16 %v243
    %v284 = vunpack.c.l.b16 %v244
    %v285 = vunpack.c.l.b16 %v245
    %v286 = vpack.c.b16 %v271, %v270
    %v287 = vpack.c.b16 %v273, %v272
    %v288 = vpack.c.b16 %v275, %v274
    %v289 = vpack.c.b16 %v277, %v276
    %v290 = vpack.c.b16 %v279, %v278
    %v291 = vpack.c.b16 %v281, %v280
    %v292 = vpack.c.b16 %v283, %v282
    %v293 = vpack.c.b16 %v285, %v284
    %302 = vmatprep.subr.bf16.mxu0 0
    %303 = vmatpush1.bf16.msra.mxu0 %v286
    %304 = vmatprep.subr.bf16.mxu0 0
    %305 = vmatpush1.bf16.msra.mxu0 %v287
    %306 = vmatprep.subr.bf16.mxu0 0
    %307 = vmatpush1.bf16.msra.mxu0 %v288
    %308 = vmatprep.subr.bf16.mxu0 0
    %309 = vmatpush1.bf16.msra.mxu0 %v289
    %310 = vmatprep.subr.bf16.mxu0 0
    %311 = vmatpush1.bf16.msra.mxu0 %v290
    %312 = vmatprep.subr.bf16.mxu0 0
    %313 = vmatpush1.bf16.msra.mxu0 %v291
    %314 = vmatprep.subr.bf16.mxu0 0
    %315 = vmatpush1.bf16.msra.mxu0 %v292
    %316 = vmatprep.subr.bf16.mxu0 0
    %317 = vmatpush1.bf16.msra.mxu0 %v293
    %318 = vmatprep.subr.bf16.mxu0 0
    %319 = vmatpush1.bf16.msra.mxu0 0
    %320 = vmatprep.subr.bf16.mxu0 0
    %321 = vmatpush1.bf16.msra.mxu0 0
    %322 = vmatprep.subr.bf16.mxu0 0
    %323 = vmatpush1.bf16.msra.mxu0 0
    %324 = vmatprep.subr.bf16.mxu0 0
    %325 = vmatpush1.bf16.msra.mxu0 0
    %326 = vmatprep.subr.bf16.mxu0 0
    %327 = vmatpush1.bf16.msra.mxu0 0
    %328 = vmatprep.subr.bf16.mxu0 0
    %329 = vmatpush1.bf16.msra.mxu0 0
    %330 = vmatprep.subr.bf16.mxu0 0
    %331 = vmatpush1.bf16.msra.mxu0 0
    %332 = vmatprep.subr.bf16.mxu0 0
    %333 = vmatpush1.bf16.msra.mxu0 0
    %334 = vmatprep.mubr.bf16.mxu0 0
    %335 = vmatmul.mubr.bf16.gmra.mrb[0].mxu0 %v247
    %v336 = vpop.f32.mrb[0].mxu0
    %v337 = vadd.f32 %v252, %v336
    %v338 = vpop.f32.mrb[0].mxu0
    %v339 = vpop.f32.mrb[0].mxu0
    %v340 = vpop.f32.mrb[0].mxu0
    %341 = vdwg.mxu0
    %342 = vst [vmem:[%s7] sm:$0xff] %v337
    // Predicated region
    $region38: #{qnetwork_forward.1} parent=1 // pred_check
      _
    $region39: #{qnetwork_forward.1} parent=1 // pred_check_branch
      %344 = sbr.rel (0) target = $region41
    $region40: #{qnetwork_forward.1} parent=1 // pred_region
      _
    $region41: #{qnetwork_forward.1} parent=1 // pred_fallthru
      _
    // Predicated region
    $region42: #{qnetwork_forward.1} parent=1 // pred_check
      _
    $region43: #{qnetwork_forward.1} parent=1 // pred_check_branch
      %346 = sbr.rel (0) target = $region45
    $region44: #{qnetwork_forward.1} parent=1 // pred_region
      _
    $region45: #{qnetwork_forward.1} parent=1 // pred_fallthru
      _
    %347 = vsyncpa [#allocation3], 1
    %348 = vsyncpa [#allocation5], 1

</llo_original>
